<compile_context>
chip_gen: v7x
topology: tpu7x:2x2x1
jax: 0.10.0
libtpu: 0.0.40
codegen_flags: <defaults>
</compile_context>

<pallas_src>
import functools

import jax
import jax.numpy as jnp
from jax.experimental import pallas as pl
from jax.experimental.pallas import tpu as pltpu

SMOOTH = 1e-5
_LANES = 128
_MAX_CHUNK_ROWS = 256   # upper bound on rows per in-kernel accumulation chunk
_N_TEMPS = 8            # estimate of live f32 temporaries per chunk row


@functools.lru_cache(maxsize=1)
def _vmem_budget_and_limit():
    """(tile-planning budget, scoped vmem limit) in bytes, generation aware."""
    vmem_bytes = 0
    try:
        vmem_bytes = int(getattr(pltpu.get_tpu_info(), "vmem_capacity_bytes", 0) or 0)
    except Exception:
        pass
    if vmem_bytes >= 96 * 1024 * 1024:            # v5e / v6e: 128 MiB VMEM
        return 80 * 1024 * 1024, 100 * 1024 * 1024
    # v7x (64 MiB per TensorCore) or unknown backend: stay conservative.
    return 32 * 1024 * 1024, 48 * 1024 * 1024


@functools.lru_cache(maxsize=1)
def _num_tensorcores():
    """Best-effort TensorCore count (v7x = 2); default 1 is always safe."""
    try:
        info = pltpu.get_tpu_info()
        for name in ("num_cores", "core_count", "num_tensorcores", "tensorcore_count"):
            v = getattr(info, name, None)
            if v:
                return max(1, min(2, int(v)))
    except Exception:
        pass
    return 1


def _plan_tiling(N, C, S, pred_itemsize, tgt_itemsize, force_rows=None):
    """Pick (n_major, n_minor, rows, chunk): n_major*n_minor*rows == S, chunk | rows."""
    if S % 8 != 0:
        # TODO(synk): ragged spatial extents take this single-block slow path; a
        # cdiv grid with a masked tail would keep the large-tile fast path.
        return 1, 1, S, S

    budget, _ = _vmem_budget_and_limit()

    # Sub-32-bit dtypes pack along sublanes: keep row tiles aligned to the
    # packed tile so DMAs / in-block slices stay relayout-free.
    pred_gran = 8 * max(1, 4 // max(1, pred_itemsize))   # f32->8, bf16->16
    tgt_gran = 8 * max(1, 4 // max(1, tgt_itemsize))     # i32->8, i16->16, i8->32
    gran = max(pred_gran, tgt_gran)

    n_major = 2 if (_num_tensorcores() >= 2 and S % 16 == 0) else 1
    span = S // n_major
    for g in (gran, pred_gran, 8):                       # relax if span disallows it
        if span % g == 0:
            gran = g
            break

    # In-kernel temporaries scale with the chunk (not the block): budget them
    # separately, then let the row tile soak up the remaining VMEM.
    per_chunk_row = _N_TEMPS * N * C * _LANES * 4
    tmp_budget = min(budget // 3, 16 * 1024 * 1024)
    chunk_cap = max(gran, min(_MAX_CHUNK_ROWS, (tmp_budget // per_chunk_row) // 8 * 8))

    per_row_in = 2 * (N * C * _LANES * pred_itemsize + N * _LANES * tgt_itemsize)
    out_bytes = 2 * 2 * N * C * 8 * _LANES * 4           # 2 accumulators, 2 buffers
    max_rows = max(gran, (budget - chunk_cap * per_chunk_row - out_bytes) // per_row_in)

    if force_rows is not None:
        rows = int(force_rows)
        assert S % rows == 0 and rows % 8 == 0, "bad tile_rows override"
        if span % rows != 0:
            n_major, span = 1, S
    else:
        rows = gran
        r = gran
        r_limit = min(span, max_rows)
        while r <= r_limit:
            if span % r == 0:
                rows = r
            r += gran

    # Chunk granularity: keep packed (bf16 / int8) slices sublane-aligned too.
    cgran = 8
    for g in (max(pred_gran, tgt_gran), pred_gran, 8):
        if rows % g == 0:
            cgran = g
            break
    chunk = cgran
    c = cgran
    c_limit = min(rows, chunk_cap)
    while c <= c_limit:
        if rows % c == 0:
            chunk = c
        c += cgran

    return n_major, span // rows, rows, chunk


def _fold_rows(x, acc_rows):
    """(N, C, R, L) -> (N, C, acc_rows, L) using sublane-aligned chunks.

    Keeps partial sums lane/sublane resident (pure VPU adds across vregs); the
    final cross-lane reduction happens once, outside the kernel.
    """
    n, c, r, l = x.shape
    if acc_rows == r:
        return x
    if acc_rows == 1:                       # tiny-input fallback (r < 8)
        return jnp.sum(x, axis=2, keepdims=True)
    assert r % acc_rows == 0
    total = x[:, :, 0:acc_rows, :]
    for s in range(1, r // acc_rows):
        total = total + x[:, :, s * acc_rows:(s + 1) * acc_rows, :]
    return total


def _dice_partial_kernel(pred_ref, tgt_ref, inter_ref, psq_ref, *,
                         chunk, n_chunks, acc_rows):
    # pred_ref : (N, C, rows, 128) logits tile
    # tgt_ref  : (N, 1, rows, 128) integer class-id tile
    # outputs  : (N, C, acc_rows, 128) f32 lane-resident partial sums; the block
    #            is resident across the minor ("arbitrary") grid axis.
    j = pl.program_id(1)

    @pl.when(j == 0)
    def _init():
        inter_ref[...] = jnp.zeros_like(inter_ref)
        psq_ref[...] = jnp.zeros_like(psq_ref)

    num_classes = pred_ref.shape[1]

    def process(start_row):
        if n_chunks == 1:                   # full-block fast path, no interior slicing
            p = pred_ref[...].astype(jnp.float32)
            tgt = tgt_ref[...].astype(jnp.int32)
        else:
            p = pred_ref[:, :, pl.ds(start_row, chunk), :].astype(jnp.float32)
            tgt = tgt_ref[:, :, pl.ds(start_row, chunk), :].astype(jnp.int32)

        # Softmax over the channel axis (non-minor axis -> VPU-only reductions).
        m = jnp.max(p, axis=1, keepdims=True)
        e = jnp.exp(p - m)
        d = jnp.sum(e, axis=1, keepdims=True)
        r = pl.reciprocal(d, approx=True)           # EUP reciprocal
        r = r * (2.0 - d * r)                       # one Newton step (psq squares errors)
        sm = e * r                                  # (N, C, chunk, 128)

        psq_ref[...] += _fold_rows(sm * sm, acc_rows)
        # One-hot mask via per-channel scalar compares (no iota / channel input).
        for cc in range(num_classes):
            hit = tgt == cc                                         # (N, 1, chunk, 128)
            contrib = jnp.where(hit, sm[:, cc:cc + 1, :, :], 0.0)
            inter_ref[:, cc:cc + 1, :, :] += _fold_rows(contrib, acc_rows)

    if n_chunks <= 8:                       # short trip counts: fully unrolled
        for ci in range(n_chunks):
            process(ci * chunk)
    else:
        def body(ci, carry):
            process(pl.multiple_of(ci * chunk, chunk))
            return carry
        jax.lax.fori_loop(0, n_chunks, body, 0, unroll=False)


@functools.partial(jax.jit, static_argnames=("tile_rows",))
def dice_loss(predict, target, weight=None, *, tile_rows=None):
    """predict: (N, C, *spatial) float logits; target: (N, *spatial) class ids."""
    N, C = predict.shape[:2]
    HW = 1
    for d in predict.shape[2:]:
        HW *= d
    # TODO(synk): H*W not a multiple of 128 needs a padded / masked-tail path.
    assert HW >= _LANES and HW % _LANES == 0, "H*W must be a multiple of 128"
    S = HW // _LANES

    pred = predict.reshape(N, C, S, _LANES)
    tgt = target.reshape(N, 1, S, _LANES)

    n_major, n_minor, rows, chunk = _plan_tiling(
        N, C, S, pred.dtype.itemsize, tgt.dtype.itemsize, force_rows=tile_rows)
    acc_rows = 8 if rows % 8 == 0 else 1
    n_chunks = rows // chunk
    assert n_chunks * chunk == rows
    _, vmem_limit = _vmem_budget_and_limit()

    part = jax.ShapeDtypeStruct((n_major, N, C, acc_rows, _LANES), jnp.float32)
    row_map = lambda i, j: (0, 0, i * n_minor + j, 0)
    out_spec = pl.BlockSpec((pl.Squeezed(), N, C, acc_rows, _LANES),
                            lambda i, j: (i, 0, 0, 0, 0))
    kernel = functools.partial(_dice_partial_kernel,
                               chunk=chunk, n_chunks=n_chunks, acc_rows=acc_rows)

    inter_p, psq_p = pl.pallas_call(
        kernel,
        out_shape=(part, part),
        grid=(n_major, n_minor),
        in_specs=[
            pl.BlockSpec((N, C, rows, _LANES), row_map),
            pl.BlockSpec((N, 1, rows, _LANES), row_map),
        ],
        out_specs=(out_spec, out_spec),
        compiler_params=pltpu.CompilerParams(
            dimension_semantics=("parallel", "arbitrary"),
            vmem_limit_bytes=vmem_limit,
        ),
    )(pred, tgt)

    # Cross-lane/sublane finish on tiny (N, C) arrays in plain JAX.
    inter = jnp.sum(inter_p, axis=(0, 3, 4))
    psq = jnp.sum(psq_p, axis=(0, 3, 4))
    # sum(one-hot) over pixels depends only on `target`: per-(N, C) histogram.
    tflat = target.reshape(N, -1).astype(jnp.int32)
    onehot_sum = jnp.sum(
        tflat[:, None, :] == jnp.arange(C, dtype=jnp.int32)[None, :, None],
        axis=-1).astype(jnp.float32)

    dice = (2.0 * inter + SMOOTH) / (psq + onehot_sum + SMOOTH)
    if weight is not None:
        w = jnp.asarray(weight, jnp.float32)
        dice = dice * (w / jnp.sum(w)) * C
    return 1.0 - jnp.mean(dice)


def _dice_loss_ref(predict, target):
    """Pure-JAX reference mirroring the PyTorch forward (weight=None)."""
    N, C = predict.shape[:2]
    p = predict.reshape(N, C, -1)
    t = target.reshape(N, -1)
    sm = jax.nn.softmax(p.astype(jnp.float32), axis=1)
    onehot = jax.nn.one_hot(t, C, axis=1, dtype=jnp.float32)
    inter = jnp.sum(sm * onehot, axis=2)
    union = jnp.sum(sm * sm, axis=2) + jnp.sum(onehot, axis=2)
    dice = (2.0 * inter + SMOOTH) / (union + SMOOTH)
    return 1.0 - jnp.mean(dice)


if __name__ == "__main__":
    key = jax.random.PRNGKey(0)
    k1, k2 = jax.random.split(key)

    # Small shape implied by the module's forward (NCHW logits, class-id map).
    N, C, H, W = 2, 4, 16, 16
    predict = jax.random.normal(k1, (N, C, H, W), dtype=jnp.float32)
    target = jax.random.randint(k2, (N, H, W), 0, C, dtype=jnp.int32)

    loss = jax.block_until_ready(dice_loss(predict, target))
    ref = _dice_loss_ref(predict, target)
    assert jnp.allclose(loss, ref, atol=1e-4, rtol=1e-4), (loss, ref)

    # Larger spatial extent: big row tiles, chunked in-kernel accumulation and
    # lane-resident (N, C, 8, 128) accumulators.
    H2 = W2 = 64
    predict2 = jax.random.normal(k1, (N, C, H2, W2), dtype=jnp.float32)
    target2 = jax.random.randint(k2, (N, H2, W2), 0, C, dtype=jnp.int32)
    loss2 = jax.block_until_ready(dice_loss(predict2, target2))
    ref2 = _dice_loss_ref(predict2, target2)
    assert jnp.allclose(loss2, ref2, atol=1e-4, rtol=1e-4), (loss2, ref2)

    # Force small row tiles so accumulation across the "arbitrary" minor grid
    # axis (init at step 0, += afterwards) is exercised as well.
    loss3 = jax.block_until_ready(dice_loss(predict2, target2, tile_rows=8))
    assert jnp.allclose(loss3, ref2, atol=1e-4, rtol=1e-4), (loss3, ref2)

    # bf16 logits + int8 class ids: halves / quarters the HBM streams while the
    # in-kernel math stays f32.
    predict3 = predict2.astype(jnp.bfloat16)
    target3 = target2.astype(jnp.int8)
    loss4 = jax.block_until_ready(dice_loss(predict3, target3))
    ref4 = _dice_loss_ref(predict3.astype(jnp.float32), target2)
    assert jnp.allclose(loss4, ref4, atol=2e-4, rtol=2e-4), (loss4, ref4)

    print("KERNEL_OK")
</pallas_src>

<mosaic_0001>
module attributes {stable_mosaic.version = 11 : i64} {
  func.func @_dice_partial_kernel(%arg0: i32, %arg1: i32, %arg2: memref<2x4x2x128xf32, #tpu.memory_space<vmem>>, %arg3: memref<2x1x2x128xi32, #tpu.memory_space<vmem>>, %arg4: memref<1x2x4x1x128xf32, #tpu.memory_space<vmem>>, %arg5: memref<1x2x4x1x128xf32, #tpu.memory_space<vmem>>) attributes {dimension_semantics = [#tpu.dimension_semantics<parallel>, #tpu.dimension_semantics<arbitrary>], iteration_bounds = array<i64: 1, 1>, scalar_prefetch = 0 : i64, scratch_operands = 0 : i64, tpu.core_type = #tpu.core_type<tc>, window_params = [{transform_indices = @transform_0, window_bounds = array<i64: 2, 4, 2, 128>}, {transform_indices = @transform_1, window_bounds = array<i64: 2, 1, 2, 128>}, {transform_indices = @transform_2, window_bounds = array<i64: 1, 2, 4, 1, 128>}, {transform_indices = @transform_3, window_bounds = array<i64: 1, 2, 4, 1, 128>}]} {
    %c0_i32 = arith.constant 0 : i32
    %0 = arith.cmpi eq, %arg1, %c0_i32 : i32
    %1 = arith.extui %0 : i1 to i32
    %c0_i32_0 = arith.constant 0 : i32
    %2 = arith.cmpi ne, %1, %c0_i32_0 : i32
    scf.if %2 {
      %cst_67 = arith.constant 0.000000e+00 : f32
      %80 = vector.broadcast %cst_67 : f32 to vector<2x4x1x128xf32>
      %c0_68 = arith.constant 0 : index
      %c0_69 = arith.constant 0 : index
      %c0_70 = arith.constant 0 : index
      %c0_71 = arith.constant 0 : index
      %c0_72 = arith.constant 0 : index
      %81 = vector.load %arg4[%c0_68, %c0_69, %c0_70, %c0_71, %c0_72] : memref<1x2x4x1x128xf32, #tpu.memory_space<vmem>>, vector<1x2x4x1x128xf32>
      %82 = vector.shape_cast %81 : vector<1x2x4x1x128xf32> to vector<2x4x1x128xf32>
      %83 = vector.shape_cast %80 : vector<2x4x1x128xf32> to vector<1x2x4x1x128xf32>
      tpu.vector_store %arg4[%c0_68, %c0_69, %c0_70, %c0_71, %c0_72], %83 {strides = array<i32>} : memref<1x2x4x1x128xf32, #tpu.memory_space<vmem>>, vector<1x2x4x1x128xf32>,
      %cst_73 = arith.constant 0.000000e+00 : f32
      %84 = vector.broadcast %cst_73 : f32 to vector<2x4x1x128xf32>
      %c0_74 = arith.constant 0 : index
      %c0_75 = arith.constant 0 : index
      %c0_76 = arith.constant 0 : index
      %c0_77 = arith.constant 0 : index
      %c0_78 = arith.constant 0 : index
      %85 = vector.load %arg5[%c0_74, %c0_75, %c0_76, %c0_77, %c0_78] : memref<1x2x4x1x128xf32, #tpu.memory_space<vmem>>, vector<1x2x4x1x128xf32>
      %86 = vector.shape_cast %85 : vector<1x2x4x1x128xf32> to vector<2x4x1x128xf32>
      %87 = vector.shape_cast %84 : vector<2x4x1x128xf32> to vector<1x2x4x1x128xf32>
      tpu.vector_store %arg5[%c0_74, %c0_75, %c0_76, %c0_77, %c0_78], %87 {strides = array<i32>} : memref<1x2x4x1x128xf32, #tpu.memory_space<vmem>>, vector<1x2x4x1x128xf32>,
    } else {
    }
    %c0 = arith.constant 0 : index
    %c0_1 = arith.constant 0 : index
    %c0_2 = arith.constant 0 : index
    %c0_3 = arith.constant 0 : index
    %3 = vector.load %arg2[%c0, %c0_1, %c0_2, %c0_3] : memref<2x4x2x128xf32, #tpu.memory_space<vmem>>, vector<2x4x2x128xf32>
    %c0_4 = arith.constant 0 : index
    %c0_5 = arith.constant 0 : index
    %c0_6 = arith.constant 0 : index
    %c0_7 = arith.constant 0 : index
    %4 = vector.load %arg3[%c0_4, %c0_5, %c0_6, %c0_7] : memref<2x1x2x128xi32, #tpu.memory_space<vmem>>, vector<2x1x2x128xi32>
    %cst = arith.constant dense<0xFF800000> : vector<2x2x128xf32>
    %5 = vector.multi_reduction <maximumf>, %3, %cst [1] : vector<2x4x2x128xf32> to vector<2x2x128xf32>
    %6 = vector.shape_cast %5 : vector<2x2x128xf32> to vector<2x1x2x128xf32>
    %7 = vector.broadcast %6 : vector<2x1x2x128xf32> to vector<2x4x2x128xf32>
    %8 = arith.subf %3, %7 : vector<2x4x2x128xf32>
    %9 = math.exp %8 : vector<2x4x2x128xf32>
    %cst_8 = arith.constant dense<0.000000e+00> : vector<2x2x128xf32>
    %10 = vector.multi_reduction <add>, %9, %cst_8 [1] : vector<2x4x2x128xf32> to vector<2x2x128xf32>
    %11 = vector.shape_cast %10 : vector<2x2x128xf32> to vector<2x1x2x128xf32>
    %12 = tpu.reciprocal %11 {approx = true} : vector<2x1x2x128xf32> -> vector<2x1x2x128xf32>
    %13 = arith.mulf %11, %12 : vector<2x1x2x128xf32>
    %cst_9 = arith.constant 2.000000e+00 : f32
    %14 = vector.broadcast %cst_9 : f32 to vector<2x1x2x128xf32>
    %15 = arith.subf %14, %13 : vector<2x1x2x128xf32>
    %16 = arith.mulf %12, %15 : vector<2x1x2x128xf32>
    %17 = vector.broadcast %16 : vector<2x1x2x128xf32> to vector<2x4x2x128xf32>
    %18 = arith.mulf %9, %17 : vector<2x4x2x128xf32>
    %c0_10 = arith.constant 0 : index
    %c0_11 = arith.constant 0 : index
    %c0_12 = arith.constant 0 : index
    %c0_13 = arith.constant 0 : index
    %c0_14 = arith.constant 0 : index
    %19 = vector.load %arg5[%c0_10, %c0_11, %c0_12, %c0_13, %c0_14] : memref<1x2x4x1x128xf32, #tpu.memory_space<vmem>>, vector<1x2x4x1x128xf32>
    %20 = vector.shape_cast %19 : vector<1x2x4x1x128xf32> to vector<2x4x1x128xf32>
    %21 = arith.mulf %18, %18 : vector<2x4x2x128xf32>
    %cst_15 = arith.constant dense<0.000000e+00> : vector<2x4x128xf32>
    %22 = vector.multi_reduction <add>, %21, %cst_15 [2] : vector<2x4x2x128xf32> to vector<2x4x128xf32>
    %23 = vector.shape_cast %22 : vector<2x4x128xf32> to vector<2x4x1x128xf32>
    %24 = arith.addf %20, %23 : vector<2x4x1x128xf32>
    %c0_16 = arith.constant 0 : index
    %c0_17 = arith.constant 0 : index
    %c0_18 = arith.constant 0 : index
    %c0_19 = arith.constant 0 : index
    %c0_20 = arith.constant 0 : index
    %25 = vector.load %arg5[%c0_16, %c0_17, %c0_18, %c0_19, %c0_20] : memref<1x2x4x1x128xf32, #tpu.memory_space<vmem>>, vector<1x2x4x1x128xf32>
    %26 = vector.shape_cast %25 : vector<1x2x4x1x128xf32> to vector<2x4x1x128xf32>
    %27 = vector.shape_cast %24 : vector<2x4x1x128xf32> to vector<1x2x4x1x128xf32>
    tpu.vector_store %arg5[%c0_16, %c0_17, %c0_18, %c0_19, %c0_20], %27 {strides = array<i32>} : memref<1x2x4x1x128xf32, #tpu.memory_space<vmem>>, vector<1x2x4x1x128xf32>,
    %c0_i32_21 = arith.constant 0 : i32
    %28 = vector.broadcast %c0_i32_21 : i32 to vector<2x1x2x128xi32>
    %29 = arith.cmpi eq, %4, %28 : vector<2x1x2x128xi32>
    %30 = vector.extract_strided_slice %18 {offsets = [0, 0, 0, 0], sizes = [2, 1, 2, 128], strides = [1, 1, 1, 1]} : vector<2x4x2x128xf32> to vector<2x1x2x128xf32>
    %cst_22 = arith.constant 0.000000e+00 : f32
    %31 = vector.broadcast %cst_22 : f32 to vector<2x1x2x128xf32>
    %32 = arith.select %29, %30, %31 : vector<2x1x2x128xi1>, vector<2x1x2x128xf32>
    %c0_23 = arith.constant 0 : index
    %c0_24 = arith.constant 0 : index
    %c0_25 = arith.constant 0 : index
    %c0_26 = arith.constant 0 : index
    %c0_27 = arith.constant 0 : index
    %33 = vector.load %arg4[%c0_23, %c0_24, %c0_25, %c0_26, %c0_27] : memref<1x2x4x1x128xf32, #tpu.memory_space<vmem>>, vector<1x2x1x1x128xf32>
    %34 = vector.shape_cast %33 : vector<1x2x1x1x128xf32> to vector<2x1x1x128xf32>
    %cst_28 = arith.constant dense<0.000000e+00> : vector<2x1x128xf32>
    %35 = vector.multi_reduction <add>, %32, %cst_28 [2] : vector<2x1x2x128xf32> to vector<2x1x128xf32>
    %36 = vector.shape_cast %35 : vector<2x1x128xf32> to vector<2x1x1x128xf32>
    %37 = arith.addf %34, %36 : vector<2x1x1x128xf32>
    %c0_29 = arith.constant 0 : index
    %c0_30 = arith.constant 0 : index
    %c0_31 = arith.constant 0 : index
    %c0_32 = arith.constant 0 : index
    %c0_33 = arith.constant 0 : index
    %38 = vector.load %arg4[%c0_29, %c0_30, %c0_31, %c0_32, %c0_33] : memref<1x2x4x1x128xf32, #tpu.memory_space<vmem>>, vector<1x2x1x1x128xf32>
    %39 = vector.shape_cast %38 : vector<1x2x1x1x128xf32> to vector<2x1x1x128xf32>
    %40 = vector.shape_cast %37 : vector<2x1x1x128xf32> to vector<1x2x1x1x128xf32>
    tpu.vector_store %arg4[%c0_29, %c0_30, %c0_31, %c0_32, %c0_33], %40 {strides = array<i32>} : memref<1x2x4x1x128xf32, #tpu.memory_space<vmem>>, vector<1x2x1x1x128xf32>,
    %c1_i32 = arith.constant 1 : i32
    %41 = vector.broadcast %c1_i32 : i32 to vector<2x1x2x128xi32>
    %42 = arith.cmpi eq, %4, %41 : vector<2x1x2x128xi32>
    %43 = vector.extract_strided_slice %18 {offsets = [0, 1, 0, 0], sizes = [2, 1, 2, 128], strides = [1, 1, 1, 1]} : vector<2x4x2x128xf32> to vector<2x1x2x128xf32>
    %cst_34 = arith.constant 0.000000e+00 : f32
    %44 = vector.broadcast %cst_34 : f32 to vector<2x1x2x128xf32>
    %45 = arith.select %42, %43, %44 : vector<2x1x2x128xi1>, vector<2x1x2x128xf32>
    %c0_35 = arith.constant 0 : index
    %c0_36 = arith.constant 0 : index
    %c1 = arith.constant 1 : index
    %c0_37 = arith.constant 0 : index
    %c0_38 = arith.constant 0 : index
    %46 = vector.load %arg4[%c0_35, %c0_36, %c1, %c0_37, %c0_38] : memref<1x2x4x1x128xf32, #tpu.memory_space<vmem>>, vector<1x2x1x1x128xf32>
    %47 = vector.shape_cast %46 : vector<1x2x1x1x128xf32> to vector<2x1x1x128xf32>
    %cst_39 = arith.constant dense<0.000000e+00> : vector<2x1x128xf32>
    %48 = vector.multi_reduction <add>, %45, %cst_39 [2] : vector<2x1x2x128xf32> to vector<2x1x128xf32>
    %49 = vector.shape_cast %48 : vector<2x1x128xf32> to vector<2x1x1x128xf32>
    %50 = arith.addf %47, %49 : vector<2x1x1x128xf32>
    %c0_40 = arith.constant 0 : index
    %c0_41 = arith.constant 0 : index
    %c1_42 = arith.constant 1 : index
    %c0_43 = arith.constant 0 : index
    %c0_44 = arith.constant 0 : index
    %51 = vector.load %arg4[%c0_40, %c0_41, %c1_42, %c0_43, %c0_44] : memref<1x2x4x1x128xf32, #tpu.memory_space<vmem>>, vector<1x2x1x1x128xf32>
    %52 = vector.shape_cast %51 : vector<1x2x1x1x128xf32> to vector<2x1x1x128xf32>
    %53 = vector.shape_cast %50 : vector<2x1x1x128xf32> to vector<1x2x1x1x128xf32>
    tpu.vector_store %arg4[%c0_40, %c0_41, %c1_42, %c0_43, %c0_44], %53 {strides = array<i32>} : memref<1x2x4x1x128xf32, #tpu.memory_space<vmem>>, vector<1x2x1x1x128xf32>,
    %c2_i32 = arith.constant 2 : i32
    %54 = vector.broadcast %c2_i32 : i32 to vector<2x1x2x128xi32>
    %55 = arith.cmpi eq, %4, %54 : vector<2x1x2x128xi32>
    %56 = vector.extract_strided_slice %18 {offsets = [0, 2, 0, 0], sizes = [2, 1, 2, 128], strides = [1, 1, 1, 1]} : vector<2x4x2x128xf32> to vector<2x1x2x128xf32>
    %cst_45 = arith.constant 0.000000e+00 : f32
    %57 = vector.broadcast %cst_45 : f32 to vector<2x1x2x128xf32>
    %58 = arith.select %55, %56, %57 : vector<2x1x2x128xi1>, vector<2x1x2x128xf32>
    %c0_46 = arith.constant 0 : index
    %c0_47 = arith.constant 0 : index
    %c2 = arith.constant 2 : index
    %c0_48 = arith.constant 0 : index
    %c0_49 = arith.constant 0 : index
    %59 = vector.load %arg4[%c0_46, %c0_47, %c2, %c0_48, %c0_49] : memref<1x2x4x1x128xf32, #tpu.memory_space<vmem>>, vector<1x2x1x1x128xf32>
    %60 = vector.shape_cast %59 : vector<1x2x1x1x128xf32> to vector<2x1x1x128xf32>
    %cst_50 = arith.constant dense<0.000000e+00> : vector<2x1x128xf32>
    %61 = vector.multi_reduction <add>, %58, %cst_50 [2] : vector<2x1x2x128xf32> to vector<2x1x128xf32>
    %62 = vector.shape_cast %61 : vector<2x1x128xf32> to vector<2x1x1x128xf32>
    %63 = arith.addf %60, %62 : vector<2x1x1x128xf32>
    %c0_51 = arith.constant 0 : index
    %c0_52 = arith.constant 0 : index
    %c2_53 = arith.constant 2 : index
    %c0_54 = arith.constant 0 : index
    %c0_55 = arith.constant 0 : index
    %64 = vector.load %arg4[%c0_51, %c0_52, %c2_53, %c0_54, %c0_55] : memref<1x2x4x1x128xf32, #tpu.memory_space<vmem>>, vector<1x2x1x1x128xf32>
    %65 = vector.shape_cast %64 : vector<1x2x1x1x128xf32> to vector<2x1x1x128xf32>
    %66 = vector.shape_cast %63 : vector<2x1x1x128xf32> to vector<1x2x1x1x128xf32>
    tpu.vector_store %arg4[%c0_51, %c0_52, %c2_53, %c0_54, %c0_55], %66 {strides = array<i32>} : memref<1x2x4x1x128xf32, #tpu.memory_space<vmem>>, vector<1x2x1x1x128xf32>,
    %c3_i32 = arith.constant 3 : i32
    %67 = vector.broadcast %c3_i32 : i32 to vector<2x1x2x128xi32>
    %68 = arith.cmpi eq, %4, %67 : vector<2x1x2x128xi32>
    %69 = vector.extract_strided_slice %18 {offsets = [0, 3, 0, 0], sizes = [2, 1, 2, 128], strides = [1, 1, 1, 1]} : vector<2x4x2x128xf32> to vector<2x1x2x128xf32>
    %cst_56 = arith.constant 0.000000e+00 : f32
    %70 = vector.broadcast %cst_56 : f32 to vector<2x1x2x128xf32>
    %71 = arith.select %68, %69, %70 : vector<2x1x2x128xi1>, vector<2x1x2x128xf32>
    %c0_57 = arith.constant 0 : index
    %c0_58 = arith.constant 0 : index
    %c3 = arith.constant 3 : index
    %c0_59 = arith.constant 0 : index
    %c0_60 = arith.constant 0 : index
    %72 = vector.load %arg4[%c0_57, %c0_58, %c3, %c0_59, %c0_60] : memref<1x2x4x1x128xf32, #tpu.memory_space<vmem>>, vector<1x2x1x1x128xf32>
    %73 = vector.shape_cast %72 : vector<1x2x1x1x128xf32> to vector<2x1x1x128xf32>
    %cst_61 = arith.constant dense<0.000000e+00> : vector<2x1x128xf32>
    %74 = vector.multi_reduction <add>, %71, %cst_61 [2] : vector<2x1x2x128xf32> to vector<2x1x128xf32>
    %75 = vector.shape_cast %74 : vector<2x1x128xf32> to vector<2x1x1x128xf32>
    %76 = arith.addf %73, %75 : vector<2x1x1x128xf32>
    %c0_62 = arith.constant 0 : index
    %c0_63 = arith.constant 0 : index
    %c3_64 = arith.constant 3 : index
    %c0_65 = arith.constant 0 : index
    %c0_66 = arith.constant 0 : index
    %77 = vector.load %arg4[%c0_62, %c0_63, %c3_64, %c0_65, %c0_66] : memref<1x2x4x1x128xf32, #tpu.memory_space<vmem>>, vector<1x2x1x1x128xf32>
    %78 = vector.shape_cast %77 : vector<1x2x1x1x128xf32> to vector<2x1x1x128xf32>
    %79 = vector.shape_cast %76 : vector<2x1x1x128xf32> to vector<1x2x1x1x128xf32>
    tpu.vector_store %arg4[%c0_62, %c0_63, %c3_64, %c0_65, %c0_66], %79 {strides = array<i32>} : memref<1x2x4x1x128xf32, #tpu.memory_space<vmem>>, vector<1x2x1x1x128xf32>,
    return
  }
  func.func @transform_0(%arg0: i32, %arg1: i32) -> (i32, i32, i32, i32) {
    %c1_i32 = arith.constant 1 : i32
    %0 = arith.muli %arg0, %c1_i32 : i32
    %1 = arith.addi %0, %arg1 : i32
    %c0_i32 = arith.constant 0 : i32
    %c0_i32_0 = arith.constant 0 : i32
    %c0_i32_1 = arith.constant 0 : i32
    %c0_i32_2 = arith.constant 0 : i32
    return %c0_i32, %c0_i32_0, %1, %c0_i32_1 : i32, i32, i32, i32
  }
  func.func @transform_1(%arg0: i32, %arg1: i32) -> (i32, i32, i32, i32) {
    %c1_i32 = arith.constant 1 : i32
    %0 = arith.muli %arg0, %c1_i32 : i32
    %1 = arith.addi %0, %arg1 : i32
    %c0_i32 = arith.constant 0 : i32
    %c0_i32_0 = arith.constant 0 : i32
    %c0_i32_1 = arith.constant 0 : i32
    %c0_i32_2 = arith.constant 0 : i32
    return %c0_i32, %c0_i32_0, %1, %c0_i32_1 : i32, i32, i32, i32
  }
  func.func @transform_2(%arg0: i32, %arg1: i32) -> (i32, i32, i32, i32, i32) {
    %c0_i32 = arith.constant 0 : i32
    %c0_i32_0 = arith.constant 0 : i32
    %c0_i32_1 = arith.constant 0 : i32
    %c0_i32_2 = arith.constant 0 : i32
    %c0_i32_3 = arith.constant 0 : i32
    return %arg0, %c0_i32, %c0_i32_0, %c0_i32_1, %c0_i32_2 : i32, i32, i32, i32, i32
  }
  func.func @transform_3(%arg0: i32, %arg1: i32) -> (i32, i32, i32, i32, i32) {
    %c0_i32 = arith.constant 0 : i32
    %c0_i32_0 = arith.constant 0 : i32
    %c0_i32_1 = arith.constant 0 : i32
    %c0_i32_2 = arith.constant 0 : i32
    %c0_i32_3 = arith.constant 0 : i32
    return %arg0, %c0_i32, %c0_i32_0, %c0_i32_1, %c0_i32_2 : i32, i32, i32, i32, i32
  }
}

</mosaic_0001>

<llo_original>
// kernel: eq.8
$region0: #{eq.8}
  %s0 = inlined_call_operand.vmem [shape: s32[2,16,16], index: 0, kind: input, shape index: {}]
  %s1 = inlined_call_operand.vmem [shape: s32[2,256], index: 1, kind: output, shape index: {}]
  $region1: #{eq.8} parent=0
    #allocation0 [shape = 'u8[8192]{0}', space=vmem, size = 0x2000, scoped, tag = 'scoped mem for output reshape']
    %v2 = vld [vmem:[%s0] ss:$8 sm:$0xf]
    %vm3 = vcmask 130048
    %4 = vst.msk [vmem:[#allocation0] ss:$8 sm:$0x3] %vm3, %v2
    %s5 = scalar_lea.vmem [#allocation0], 4294967281
    %6 = vst.msk [vmem:[%s5] ss:$8 sm:$0xc] %vm3, %v2
    %s7 = scalar_lea.vmem %s0, 7
    %s8 = smov 3
    %v9 = vld [vmem:[%s7] ss:$16 sm:%s8]
    %s10 = scalar_lea.vmem %s0, 4294967279
    %s11 = smov 12
    %v12 = vld [vmem:[%s10] ss:$16 sm:%s11]
    %vm13 = vcmask 1043458
    %v14 = vsel %vm13, %v12, %v9
    %15 = vrot.lane.b32.xlu0 %v14, 112
    %v16 = vpop.permute.xlu0 %15
    %vm17 = vcmask 1048448
    %18 = vst.msk [vmem:[#allocation0] sm:$0x3] %vm17, %v16
    %s19 = scalar_lea.vmem [#allocation0], 6
    %20 = vst.msk [vmem:[%s19] sm:$0xc] %vm17, %v16
    %s21 = scalar_lea.vmem %s0, 6
    %s22 = smov 3
    %v23 = vld [vmem:[%s21] ss:$16 sm:%s22]
    %s24 = scalar_lea.vmem %s0, 4294967278
    %s25 = smov 12
    %v26 = vld [vmem:[%s24] ss:$16 sm:%s25]
    %vm27 = vcmask 1043458
    %v28 = vsel %vm27, %v26, %v23
    %29 = vrot.lane.b32.xlu0 %v28, 96
    %v30 = vpop.permute.xlu0 %29
    %vm31 = vcmask 917248
    %32 = vst.msk [vmem:[#allocation0] sm:$0x3] %vm31, %v30
    %s33 = scalar_lea.vmem [#allocation0], 6
    %34 = vst.msk [vmem:[%s33] sm:$0xc] %vm31, %v30
    %s35 = scalar_lea.vmem %s0, 5
    %s36 = smov 3
    %v37 = vld [vmem:[%s35] ss:$16 sm:%s36]
    %s38 = scalar_lea.vmem %s0, 4294967277
    %s39 = smov 12
    %v40 = vld [vmem:[%s38] ss:$16 sm:%s39]
    %vm41 = vcmask 1043458
    %v42 = vsel %vm41, %v40, %v37
    %43 = vrot.lane.b32.xlu0 %v42, 80
    %v44 = vpop.permute.xlu0 %43
    %vm45 = vcmask 786048
    %46 = vst.msk [vmem:[#allocation0] sm:$0x3] %vm45, %v44
    %s47 = scalar_lea.vmem [#allocation0], 6
    %48 = vst.msk [vmem:[%s47] sm:$0xc] %vm45, %v44
    %s49 = scalar_lea.vmem %s0, 4
    %s50 = smov 3
    %v51 = vld [vmem:[%s49] ss:$16 sm:%s50]
    %s52 = scalar_lea.vmem %s0, 4294967276
    %s53 = smov 12
    %v54 = vld [vmem:[%s52] ss:$16 sm:%s53]
    %vm55 = vcmask 1043458
    %v56 = vsel %vm55, %v54, %v51
    %57 = vrot.lane.b32.xlu0 %v56, 64
    %v58 = vpop.permute.xlu0 %57
    %vm59 = vcmask 654848
    %60 = vst.msk [vmem:[#allocation0] sm:$0x3] %vm59, %v58
    %s61 = scalar_lea.vmem [#allocation0], 6
    %62 = vst.msk [vmem:[%s61] sm:$0xc] %vm59, %v58
    %s63 = scalar_lea.vmem %s0, 3
    %s64 = smov 3
    %v65 = vld [vmem:[%s63] ss:$16 sm:%s64]
    %s66 = scalar_lea.vmem %s0, 4294967275
    %s67 = smov 12
    %v68 = vld [vmem:[%s66] ss:$16 sm:%s67]
    %vm69 = vcmask 1043458
    %v70 = vsel %vm69, %v68, %v65
    %71 = vrot.lane.b32.xlu0 %v70, 48
    %v72 = vpop.permute.xlu0 %71
    %vm73 = vcmask 523648
    %74 = vst.msk [vmem:[#allocation0] sm:$0x3] %vm73, %v72
    %s75 = scalar_lea.vmem [#allocation0], 6
    %76 = vst.msk [vmem:[%s75] sm:$0xc] %vm73, %v72
    %s77 = scalar_lea.vmem %s0, 2
    %s78 = smov 3
    %v79 = vld [vmem:[%s77] ss:$16 sm:%s78]
    %s80 = scalar_lea.vmem %s0, 4294967274
    %s81 = smov 12
    %v82 = vld [vmem:[%s80] ss:$16 sm:%s81]
    %vm83 = vcmask 1043458
    %v84 = vsel %vm83, %v82, %v79
    %85 = vrot.lane.b32.xlu0 %v84, 32
    %v86 = vpop.permute.xlu0 %85
    %vm87 = vcmask 392448
    %88 = vst.msk [vmem:[#allocation0] sm:$0x3] %vm87, %v86
    %s89 = scalar_lea.vmem [#allocation0], 6
    %90 = vst.msk [vmem:[%s89] sm:$0xc] %vm87, %v86
    %s91 = scalar_lea.vmem %s0, 1
    %s92 = smov 3
    %v93 = vld [vmem:[%s91] ss:$16 sm:%s92]
    %s94 = scalar_lea.vmem %s0, 4294967273
    %s95 = smov 12
    %v96 = vld [vmem:[%s94] ss:$16 sm:%s95]
    %vm97 = vcmask 1043458
    %v98 = vsel %vm97, %v96, %v93
    %99 = vrot.lane.b32.xlu0 %v98, 16
    %v100 = vpop.permute.xlu0 %99
    %vm101 = vcmask 261248
    %102 = vst.msk [vmem:[#allocation0] sm:$0x3] %vm101, %v100
    %s103 = scalar_lea.vmem [#allocation0], 6
    %104 = vst.msk [vmem:[%s103] sm:$0xc] %vm101, %v100
    %s106 = sshllo.u32 0, 2
    %v108 = vld [vmem:[#allocation0] sm:%s106]
    %s109 = sshllo.u32 0, 2
    %110 = vst [vmem:[%s1] sm:%s109] %v108
    %s111 = scalar_lea.vmem [#allocation0], 8
    %v112 = vld [vmem:[%s111] sm:%s106]
    %s113 = sshllo.u32 0, 2
    %s114 = scalar_lea.vmem %s1, 2
    %115 = vst [vmem:[%s114] sm:%s113] %v112

// kernel: dice_loss.1
$region0: #{dice_loss.1}
  #allocation0 [shape = 'u32[]', space=smem, size = 0x4, offset = 0x4, fixed_abs, tag = 'smem constant byte address 0x4 - core index']
  #allocation1 [shape = 'u32[144,128]{1,0:T(1,128)}', space=vmem, size = 0x12000, scoped, tag = 'internal scratch']
  %s0 = inlined_call_operand.vmem [shape: f32[2,4,2,128], index: 0, kind: input, shape index: {}]
  %s1 = inlined_call_operand.vmem [shape: s32[2,1,2,128], index: 1, kind: input, shape index: {}]
  %s2 = inlined_call_operand.vmem [shape: f32[1,2,4,1,128], index: 2, kind: output, shape index: {0}]
  %s3 = inlined_call_operand.vmem [shape: f32[1,2,4,1,128], index: 3, kind: output, shape index: {1}]
  %4 = xla_tuple %s2, %s3
  %s5 = sld [smem:[#allocation0]]
  $region30: #{dice_loss.1} parent=0
    _
  %s7 = ssub.s32 1, %s5
  %s8 = scalar_select 0, %s7, %s5
  // Predicated region
  $region2: #{dice_loss.1} parent=0 // pred_check
    _
  $region3: #{dice_loss.1} parent=0 // pred_check_branch
    %10 = sbr.rel (0) target = $region5
  $region4: #{dice_loss.1} parent=0 // pred_region
    %s11 = sadd.s32 0, 0
    %p12 = scmp.lt.s32.totalorder %s11, 0
    %s13 = scalar_select %p12, %s11, 0
    %s14 = smul.addr %s13, 2
    %s15 = scalar_lea.vmem %s0, %s14
    %s16 = sadd.s32 0, 0
  $region5: #{dice_loss.1} parent=0 // pred_fallthru
    _
  // Predicated region
  $region6: #{dice_loss.1} parent=0 // pred_check
    _
  $region7: #{dice_loss.1} parent=0 // pred_check_branch
    %18 = sbr.rel (0) target = $region9
  $region8: #{dice_loss.1} parent=0 // pred_region
    %s19 = sadd.s32 0, 0
    %p20 = scmp.lt.s32.totalorder %s19, 0
    %s21 = scalar_select %p20, %s19, 0
    %s22 = smul.addr %s21, 2
    %s23 = scalar_lea.vmem %s1, %s22
    %s24 = sadd.s32 0, 0
  $region9: #{dice_loss.1} parent=0 // pred_fallthru
    _
  %s25 = sadd.s32 0, 0
  %p26 = scmp.lt.s32.totalorder %s25, 0
  %s27 = scalar_select %p26, %s25, 0
  %s28 = smul.addr %s27, 2
  %s29 = scalar_lea.vmem %s0, %s28
  %s30 = sadd.s32 0, 0
  %p31 = scmp.lt.s32.totalorder %s30, 0
  %s32 = scalar_select %p31, %s30, 0
  %s33 = smul.addr %s32, 2
  %s34 = scalar_lea.vmem %s1, %s33
  %s35 = sadd.s32 0, 0
  %p36 = scmp.lt.s32.totalorder %s35, 0
  %s37 = scalar_select %p36, %s35, 0
  %s38 = smul.addr %s37, 2
  %s39 = scalar_lea.vmem %s0, %s38
  %s40 = sadd.s32 0, 0
  %s41 = sadd.s32 0, 0
  %p42 = scmp.lt.s32.totalorder %s41, 0
  %s43 = scalar_select %p42, %s41, 0
  %s44 = smul.addr %s43, 2
  %s45 = scalar_lea.vmem %s1, %s44
  %s46 = sadd.s32 0, 0
  %p47 = scmp.eq.s32.totalorder 0, 0
  // Predicated region
  $region10: #{dice_loss.1} parent=0 // pred_check
    %p48 = pneg %p47
  $region11: #{dice_loss.1} parent=0 // pred_check_branch
    %50 = sbr.rel (%p48) target = $region13
  $region12: #{dice_loss.1} parent=0 // pred_region
    %51 = vst [vmem:[%s2] sm:$0x1] 0.0
    %52 = vst [vmem:[%s2 + $0x1] sm:$0x1] 0.0
    %53 = vst [vmem:[%s2 + $0x2] sm:$0x1] 0.0
    %54 = vst [vmem:[%s2 + $0x3] sm:$0x1] 0.0
    %55 = vst [vmem:[%s2 + $0x4] sm:$0x1] 0.0
    %56 = vst [vmem:[%s2 + $0x5] sm:$0x1] 0.0
    %57 = vst [vmem:[%s2 + $0x6] sm:$0x1] 0.0
    %58 = vst [vmem:[%s2 + $0x7] sm:$0x1] 0.0
    %59 = vst [vmem:[%s3] sm:$0x1] 0.0
    %60 = vst [vmem:[%s3 + $0x1] sm:$0x1] 0.0
    %61 = vst [vmem:[%s3 + $0x2] sm:$0x1] 0.0
    %62 = vst [vmem:[%s3 + $0x3] sm:$0x1] 0.0
    %63 = vst [vmem:[%s3 + $0x4] sm:$0x1] 0.0
    %64 = vst [vmem:[%s3 + $0x5] sm:$0x1] 0.0
    %65 = vst [vmem:[%s3 + $0x6] sm:$0x1] 0.0
    %66 = vst [vmem:[%s3 + $0x7] sm:$0x1] 0.0
  $region13: #{dice_loss.1} parent=0 // pred_fallthru
    _
  %v67 = vld [vmem:[%s39] sm:$0x3]
  %v68 = vld [vmem:[%s39 + $0x2] sm:$0x3]
  %v69 = vld [vmem:[%s39 + $0x4] sm:$0x3]
  %v70 = vld [vmem:[%s39 + $0x6] sm:$0x3]
  %v71 = vld [vmem:[%s39 + $0x8] sm:$0x3]
  %v72 = vld [vmem:[%s39 + $0xa] sm:$0x3]
  %v73 = vld [vmem:[%s39 + $0xc] sm:$0x3]
  %v74 = vld [vmem:[%s39 + $0xe] sm:$0x3]
  %v75 = vld [vmem:[%s45] sm:$0x3]
  %v76 = vld [vmem:[%s45 + $0x2] sm:$0x3]
  %vm77 = vcmask 1041408
  %v78 = vsel %vm77, %v67, -inf
  %v79 = vsel %vm77, %v68, -inf
  %v80 = vsel %vm77, %v69, -inf
  %v81 = vmax.f32 %v78, %v80
  %v82 = vsel %vm77, %v70, -inf
  %v83 = vmax.f32 %v79, %v82
  %v84 = vmax.f32 %v81, %v83
  %v85 = vsel %vm77, %v71, -inf
  %v86 = vsel %vm77, %v72, -inf
  %v87 = vsel %vm77, %v73, -inf
  %v88 = vmax.f32 %v85, %v87
  %v89 = vsel %vm77, %v74, -inf
  %v90 = vmax.f32 %v86, %v89
  %v91 = vmax.f32 %v88, %v90
  %v92 = vsub.f32 %v67, %v84
  %v93 = vsub.f32 %v68, %v84
  %v94 = vsub.f32 %v69, %v84
  %v95 = vsub.f32 %v70, %v84
  %v96 = vsub.f32 %v71, %v91
  %v97 = vsub.f32 %v72, %v91
  %v98 = vsub.f32 %v73, %v91
  %v99 = vsub.f32 %v74, %v91
  %v100 = vmul.f32 %v92, 1.442695
  %v101 = vpow.pop %v100
  %v102 = vmul.f32 %v93, 1.442695
  %v103 = vpow.pop %v102
  %v104 = vmul.f32 %v94, 1.442695
  %v105 = vpow.pop %v104
  %v106 = vmul.f32 %v95, 1.442695
  %v107 = vpow.pop %v106
  %v108 = vmul.f32 %v96, 1.442695
  %v109 = vpow.pop %v108
  %v110 = vmul.f32 %v97, 1.442695
  %v111 = vpow.pop %v110
  %v112 = vmul.f32 %v98, 1.442695
  %v113 = vpow.pop %v112
  %v114 = vmul.f32 %v99, 1.442695
  %v115 = vpow.pop %v114
  %v116 = vsel %vm77, %v101, 0.0
  %v117 = vsel %vm77, %v103, 0.0
  %v118 = vadd.f32 %v116, %v117
  %v119 = vsel %vm77, %v105, 0.0
  %v120 = vadd.f32 %v118, %v119
  %v121 = vsel %vm77, %v107, 0.0
  %v122 = vadd.f32 %v120, %v121
  %v123 = vsel %vm77, %v109, 0.0
  %v124 = vsel %vm77, %v111, 0.0
  %v125 = vadd.f32 %v123, %v124
  %v126 = vsel %vm77, %v113, 0.0
  %v127 = vadd.f32 %v125, %v126
  %v128 = vsel %vm77, %v115, 0.0
  %v129 = vadd.f32 %v127, %v128
  %v130 = vrcp.pop %v122
  %v131 = vrcp.pop %v129
  %v132 = vmul.f32 %v122, %v130
  %v133 = vmul.f32 %v129, %v131
  %v134 = vsub.f32 2.0, %v132
  %v135 = vsub.f32 2.0, %v133
  %v136 = vmul.f32 %v130, %v134
  %v137 = vmul.f32 %v131, %v135
  %v138 = vmul.f32 %v101, %v136
  %v139 = vmul.f32 %v103, %v136
  %v140 = vmul.f32 %v105, %v136
  %v141 = vmul.f32 %v107, %v136
  %v142 = vmul.f32 %v109, %v137
  %v143 = vmul.f32 %v111, %v137
  %v144 = vmul.f32 %v113, %v137
  %v145 = vmul.f32 %v115, %v137
  %v146 = vld [vmem:[%s3] sm:$0x1]
  %v147 = vld [vmem:[%s3 + $0x1] sm:$0x1]
  %v148 = vld [vmem:[%s3 + $0x2] sm:$0x1]
  %v149 = vld [vmem:[%s3 + $0x3] sm:$0x1]
  %v150 = vld [vmem:[%s3 + $0x4] sm:$0x1]
  %v151 = vld [vmem:[%s3 + $0x5] sm:$0x1]
  %v152 = vld [vmem:[%s3 + $0x6] sm:$0x1]
  %v153 = vld [vmem:[%s3 + $0x7] sm:$0x1]
  %v154 = vmul.f32 %v138, %v138
  %v155 = vmul.f32 %v139, %v139
  %v156 = vmul.f32 %v140, %v140
  %v157 = vmul.f32 %v141, %v141
  %v158 = vmul.f32 %v142, %v142
  %v159 = vmul.f32 %v143, %v143
  %v160 = vmul.f32 %v144, %v144
  %v161 = vmul.f32 %v145, %v145
  %v162 = vsel %vm77, %v154, 0.0
  %v163 = vrot.slane %v162, 4
  %v164 = vadd.f32 %v162, %v163
  %v165 = vrot.slane %v164, 2
  %v166 = vadd.f32 %v164, %v165
  %v167 = vrot.slane %v166, 1
  %v168 = vadd.f32 %v166, %v167
  %v169 = vsel %vm77, %v155, 0.0
  %v170 = vrot.slane %v169, 4
  %v171 = vadd.f32 %v169, %v170
  %v172 = vrot.slane %v171, 2
  %v173 = vadd.f32 %v171, %v172
  %v174 = vrot.slane %v173, 1
  %v175 = vadd.f32 %v173, %v174
  %v176 = vsel %vm77, %v156, 0.0
  %v177 = vrot.slane %v176, 4
  %v178 = vadd.f32 %v176, %v177
  %v179 = vrot.slane %v178, 2
  %v180 = vadd.f32 %v178, %v179
  %v181 = vrot.slane %v180, 1
  %v182 = vadd.f32 %v180, %v181
  %v183 = vsel %vm77, %v157, 0.0
  %v184 = vrot.slane %v183, 4
  %v185 = vadd.f32 %v183, %v184
  %v186 = vrot.slane %v185, 2
  %v187 = vadd.f32 %v185, %v186
  %v188 = vrot.slane %v187, 1
  %v189 = vadd.f32 %v187, %v188
  %v190 = vsel %vm77, %v158, 0.0
  %v191 = vrot.slane %v190, 4
  %v192 = vadd.f32 %v190, %v191
  %v193 = vrot.slane %v192, 2
  %v194 = vadd.f32 %v192, %v193
  %v195 = vrot.slane %v194, 1
  %v196 = vadd.f32 %v194, %v195
  %v197 = vsel %vm77, %v159, 0.0
  %v198 = vrot.slane %v197, 4
  %v199 = vadd.f32 %v197, %v198
  %v200 = vrot.slane %v199, 2
  %v201 = vadd.f32 %v199, %v200
  %v202 = vrot.slane %v201, 1
  %v203 = vadd.f32 %v201, %v202
  %v204 = vsel %vm77, %v160, 0.0
  %v205 = vrot.slane %v204, 4
  %v206 = vadd.f32 %v204, %v205
  %v207 = vrot.slane %v206, 2
  %v208 = vadd.f32 %v206, %v207
  %v209 = vrot.slane %v208, 1
  %v210 = vadd.f32 %v208, %v209
  %v211 = vsel %vm77, %v161, 0.0
  %v212 = vrot.slane %v211, 4
  %v213 = vadd.f32 %v211, %v212
  %v214 = vrot.slane %v213, 2
  %v215 = vadd.f32 %v213, %v214
  %v216 = vrot.slane %v215, 1
  %v217 = vadd.f32 %v215, %v216
  %v218 = vadd.f32 %v146, %v168
  %v219 = vadd.f32 %v147, %v175
  %v220 = vadd.f32 %v148, %v182
  %v221 = vadd.f32 %v149, %v189
  %v222 = vadd.f32 %v150, %v196
  %v223 = vadd.f32 %v151, %v203
  %v224 = vadd.f32 %v152, %v210
  %v225 = vadd.f32 %v153, %v217
  %226 = vst [vmem:[%s3] sm:$0x1] %v218
  %227 = vst [vmem:[%s3 + $0x1] sm:$0x1] %v219
  %228 = vst [vmem:[%s3 + $0x2] sm:$0x1] %v220
  %229 = vst [vmem:[%s3 + $0x3] sm:$0x1] %v221
  %230 = vst [vmem:[%s3 + $0x4] sm:$0x1] %v222
  %231 = vst [vmem:[%s3 + $0x5] sm:$0x1] %v223
  %232 = vst [vmem:[%s3 + $0x6] sm:$0x1] %v224
  %233 = vst [vmem:[%s3 + $0x7] sm:$0x1] %v225
  %vm234 = vcmp.eq.s32.totalorder %v75, 0
  %vm235 = vcmp.eq.s32.totalorder %v76, 0
  %v236 = vsel %vm234, %v138, 0.0
  %v237 = vsel %vm235, %v142, 0.0
  %v238 = vld [vmem:[%s2] sm:$0x1]
  %v239 = vld [vmem:[%s2 + $0x4] sm:$0x1]
  %v240 = vsel %vm77, %v236, 0.0
  %v241 = vrot.slane %v240, 4
  %v242 = vadd.f32 %v240, %v241
  %v243 = vrot.slane %v242, 2
  %v244 = vadd.f32 %v242, %v243
  %v245 = vrot.slane %v244, 1
  %v246 = vadd.f32 %v244, %v245
  %v247 = vsel %vm77, %v237, 0.0
  %v248 = vrot.slane %v247, 4
  %v249 = vadd.f32 %v247, %v248
  %v250 = vrot.slane %v249, 2
  %v251 = vadd.f32 %v249, %v250
  %v252 = vrot.slane %v251, 1
  %v253 = vadd.f32 %v251, %v252
  %v254 = vadd.f32 %v238, %v246
  %v255 = vadd.f32 %v239, %v253
  %256 = vst [vmem:[%s2] sm:$0x1] %v254
  %257 = vst [vmem:[%s2 + $0x4] sm:$0x1] %v255
  %vm258 = vcmp.eq.s32.totalorder %v75, 1
  %vm259 = vcmp.eq.s32.totalorder %v76, 1
  %v260 = vsel %vm258, %v139, 0.0
  %v261 = vsel %vm259, %v143, 0.0
  %s262 = scalar_lea.vmem %s2, 1
  %v263 = vld [vmem:[%s262] sm:$0x1]
  %v264 = vld [vmem:[%s262 + $0x4] sm:$0x1]
  %v265 = vsel %vm77, %v260, 0.0
  %v266 = vrot.slane %v265, 4
  %v267 = vadd.f32 %v265, %v266
  %v268 = vrot.slane %v267, 2
  %v269 = vadd.f32 %v267, %v268
  %v270 = vrot.slane %v269, 1
  %v271 = vadd.f32 %v269, %v270
  %v272 = vsel %vm77, %v261, 0.0
  %v273 = vrot.slane %v272, 4
  %v274 = vadd.f32 %v272, %v273
  %v275 = vrot.slane %v274, 2
  %v276 = vadd.f32 %v274, %v275
  %v277 = vrot.slane %v276, 1
  %v278 = vadd.f32 %v276, %v277
  %v279 = vadd.f32 %v263, %v271
  %v280 = vadd.f32 %v264, %v278
  %281 = vst [vmem:[%s262] sm:$0x1] %v279
  %282 = vst [vmem:[%s262 + $0x4] sm:$0x1] %v280
  %vm283 = vcmp.eq.s32.totalorder %v75, 2
  %vm284 = vcmp.eq.s32.totalorder %v76, 2
  %v285 = vsel %vm283, %v140, 0.0
  %v286 = vsel %vm284, %v144, 0.0
  %s287 = scalar_lea.vmem %s2, 2
  %v288 = vld [vmem:[%s287] sm:$0x1]
  %v289 = vld [vmem:[%s287 + $0x4] sm:$0x1]
  %v290 = vsel %vm77, %v285, 0.0
  %v291 = vrot.slane %v290, 4
  %v292 = vadd.f32 %v290, %v291
  %v293 = vrot.slane %v292, 2
  %v294 = vadd.f32 %v292, %v293
  %v295 = vrot.slane %v294, 1
  %v296 = vadd.f32 %v294, %v295
  %v297 = vsel %vm77, %v286, 0.0
  %v298 = vrot.slane %v297, 4
  %v299 = vadd.f32 %v297, %v298
  %v300 = vrot.slane %v299, 2
  %v301 = vadd.f32 %v299, %v300
  %v302 = vrot.slane %v301, 1
  %v303 = vadd.f32 %v301, %v302
  %v304 = vadd.f32 %v288, %v296
  %v305 = vadd.f32 %v289, %v303
  %306 = vst [vmem:[%s287] sm:$0x1] %v304
  %307 = vst [vmem:[%s287 + $0x4] sm:$0x1] %v305
  %vm308 = vcmp.eq.s32.totalorder %v75, 3
  %vm309 = vcmp.eq.s32.totalorder %v76, 3
  %v310 = vsel %vm308, %v141, 0.0
  %v311 = vsel %vm309, %v145, 0.0
  %s312 = scalar_lea.vmem %s2, 3
  %v313 = vld [vmem:[%s312] sm:$0x1]
  %v314 = vld [vmem:[%s312 + $0x4] sm:$0x1]
  %v315 = vsel %vm77, %v310, 0.0
  %v316 = vrot.slane %v315, 4
  %v317 = vadd.f32 %v315, %v316
  %v318 = vrot.slane %v317, 2
  %v319 = vadd.f32 %v317, %v318
  %v320 = vrot.slane %v319, 1
  %v321 = vadd.f32 %v319, %v320
  %v322 = vsel %vm77, %v311, 0.0
  %v323 = vrot.slane %v322, 4
  %v324 = vadd.f32 %v322, %v323
  %v325 = vrot.slane %v324, 2
  %v326 = vadd.f32 %v324, %v325
  %v327 = vrot.slane %v326, 1
  %v328 = vadd.f32 %v326, %v327
  %v329 = vadd.f32 %v313, %v321
  %v330 = vadd.f32 %v314, %v328
  %331 = vst [vmem:[%s312] sm:$0x1] %v329
  %332 = vst [vmem:[%s312 + $0x4] sm:$0x1] %v330
  // Predicated region
  $region14: #{dice_loss.1} parent=0 // pred_check
    _
  $region15: #{dice_loss.1} parent=0 // pred_check_branch
    %334 = sbr.rel (0) target = $region17
  $region16: #{dice_loss.1} parent=0 // pred_region
    _
  $region17: #{dice_loss.1} parent=0 // pred_fallthru
    _
  // Predicated region
  $region18: #{dice_loss.1} parent=0 // pred_check
    _
  $region19: #{dice_loss.1} parent=0 // pred_check_branch
    %336 = sbr.rel (0) target = $region21
  $region20: #{dice_loss.1} parent=0 // pred_region
    _
  $region21: #{dice_loss.1} parent=0 // pred_fallthru
    _
  // Predicated region
  $region22: #{dice_loss.1} parent=0 // pred_check
    _
  $region23: #{dice_loss.1} parent=0 // pred_check_branch
    %338 = sbr.rel (0) target = $region25
  $region24: #{dice_loss.1} parent=0 // pred_region
    _
  $region25: #{dice_loss.1} parent=0 // pred_fallthru
    _
  // Predicated region
  $region26: #{dice_loss.1} parent=0 // pred_check
    _
  $region27: #{dice_loss.1} parent=0 // pred_check_branch
    %340 = sbr.rel (0) target = $region29
  $region28: #{dice_loss.1} parent=0 // pred_region
    _
  $region29: #{dice_loss.1} parent=0 // pred_fallthru
    _

</llo_original>
